<compile_context>
chip_gen: v6e
topology: v6e:2x2x1
jax: 0.10.0
libtpu: 0.0.40
codegen_flags: <defaults>
</compile_context>

<pallas_src>
import functools

import jax
import jax.numpy as jnp
from jax.experimental import pallas as pl
from jax.experimental.pallas import tpu as pltpu


def _round_up(x, m):
    return ((x + m - 1) // m) * m


def _choose_edge_tile(edge_tile, n_edges, nd_pad, ns_pad, neurons):
    """Pick the per-step edge tile (lane dimension of every block)."""
    te = _round_up(max(128, min(edge_tile, max(n_edges, 1))), 128)
    # >= 2 grid steps when there is enough work: v7x has two TensorCores
    # (dimension_semantics=("parallel",) shards the edge axis across them) and
    # the pipeline needs >1 step to overlap anything at all.
    if n_edges > 128:
        te = min(te, _round_up(-(-n_edges // 2), 128))
    # Keep the per-step working set (one-hot intermediates + f32 activations,
    # double-buffered index/output blocks) comfortably inside VMEM on every
    # generation (v7x: 64 MiB physical, 32 MiB default scoped limit).
    bytes_per_edge = 2 * (nd_pad + ns_pad) + 4 * (6 * neurons + 8)
    te_budget = max(128, ((8 * 1024 * 1024) // bytes_per_edge) // 128 * 128)
    return max(128, min(te, te_budget))


def _linears_kernel(*refs, aggregator):
    """One edge-tile of the Linears forward (feature-major layout).

    refs (concatenate): row, col, drug_T, dis_T, w1a_T, w1b_T, b1, w2, b2, out
    refs (mean/sum/mul): row, col, drug_T, dis_T, w1_T,        b1, w2, b2, out
    """
    if aggregator == "concatenate":
        (row_ref, col_ref, drug_t_ref, dis_t_ref,
         w1a_t_ref, w1b_t_ref, b1_ref, w2_ref, b2_ref, o_ref) = refs
    else:
        (row_ref, col_ref, drug_t_ref, dis_t_ref,
         w1_t_ref, b1_ref, w2_ref, b2_ref, o_ref) = refs

    row = row_ref[...]                       # (1, te) int32, lane-dense
    col = col_ref[...]                       # (1, te) int32
    te = row.shape[1]
    nd = drug_t_ref.shape[1]                 # padded drug-node count
    ns = dis_t_ref.shape[1]                  # padded disease-node count
    cdt = drug_t_ref.dtype                   # transport/MXU dtype (bf16)

    # In-kernel gather: build a one-hot (nodes, te) on the VPU and contract it
    # on the MXU against the resident feature-major table -> (neurons, te) f32.
    # Exact: each output element sums exactly one 0/1-weighted bf16 value.
    drug_oh = (jax.lax.broadcasted_iota(jnp.int32, (nd, te), 0) == row).astype(cdt)
    dis_oh = (jax.lax.broadcasted_iota(jnp.int32, (ns, te), 0) == col).astype(cdt)
    drug_t = jnp.dot(drug_t_ref[...], drug_oh, preferred_element_type=jnp.float32)
    dis_t = jnp.dot(dis_t_ref[...], dis_oh, preferred_element_type=jnp.float32)

    if aggregator == "concatenate":
        # cat([drug, dis], -1) @ W1 == drug @ W1[:n] + dis @ W1[n:]   (here
        # everything is transposed: h_T = W1a_T @ drug_T + W1b_T @ dis_T).
        # The .astype back to bf16 is lossless (values came from a bf16 table).
        h = (jnp.dot(w1a_t_ref[...], drug_t.astype(cdt),
                     preferred_element_type=jnp.float32)
             + jnp.dot(w1b_t_ref[...], dis_t.astype(cdt),
                       preferred_element_type=jnp.float32))
    else:
        if aggregator == "mean":
            z_t = (drug_t + dis_t) * 0.5
        elif aggregator == "sum":
            z_t = drug_t + dis_t
        elif aggregator == "mul":
            z_t = drug_t * dis_t
        else:
            raise ValueError(f"unknown aggregator {aggregator!r}")
        h = jnp.dot(w1_t_ref[...], z_t.astype(cdt),
                    preferred_element_type=jnp.float32)

    # Bias + ReLU: b1 is a (neurons, 1) column, broadcast along the lanes.
    h = jnp.maximum(h + b1_ref[...], 0.0)                 # (neurons, te) f32

    # Second Linear has a single output feature: VPU multiply against the
    # (neurons, 1) w2 column + sublane (XLU) reduce.  The result is already
    # lane-dense (1, te), so the store is unmasked along lanes.
    out_row = jnp.sum(h * w2_ref[...], axis=0, keepdims=True) + b2_ref[0, 0]
    o_ref[...] = out_row.astype(o_ref.dtype)


def linears_forward(z_drug, z_disease, edge_label_index, params,
                    aggregator="concatenate", edge_tile=1024,
                    activation_dtype=jnp.bfloat16):
    """Pallas-backed forward of `Linears`.

    z_drug:           (num_drugs, neurons)     float32
    z_disease:        (num_diseases, neurons)  float32
    edge_label_index: (2, E)                   int32
    params: dict from init_params
    returns (E,) float32
    """
    neurons = z_drug.shape[1]

    # Feature-major (transposed) bf16 tables, padded along the node (lane)
    # axis to a multiple of 8.  Padded columns are zero and never selected by
    # the one-hot (indices are always < real node count).
    def prep_table(z):
        n_nodes = z.shape[0]
        n_pad = _round_up(max(n_nodes, 8), 8)
        zt = z.T.astype(activation_dtype)             # (neurons, n_nodes)
        if n_pad != n_nodes:
            zt = jnp.pad(zt, ((0, 0), (0, n_pad - n_nodes)))
        return zt

    drug_t = prep_table(z_drug)        # (neurons, Nd_pad)  VMEM-resident
    dis_t = prep_table(z_disease)      # (neurons, Ns_pad)  VMEM-resident

    row = edge_label_index[0].astype(jnp.int32)
    col = edge_label_index[1].astype(jnp.int32)
    E = row.shape[0]

    te = _choose_edge_tile(edge_tile, E, drug_t.shape[1], dis_t.shape[1], neurons)
    E_pad = _round_up(E, te)
    if E_pad != E:
        # Pad only the O(E) int32 indices (never the activation stream); the
        # padded tail uses node 0 and is sliced off below.
        row = jnp.pad(row, (0, E_pad - E))
        col = jnp.pad(col, (0, E_pad - E))
    row2d = row.reshape(1, E_pad)
    col2d = col.reshape(1, E_pad)

    # W1 in bf16 for the MXU fast path; biases and w2 stay f32 (f32 accumulate).
    if aggregator == "concatenate":
        weight_args = (params["w1a"].T.astype(activation_dtype),
                       params["w1b"].T.astype(activation_dtype))
    else:
        weight_args = (params["w1a"].T.astype(activation_dtype),)
    b1_col = params["b1"].reshape(-1, 1).astype(jnp.float32)     # (neurons, 1)
    w2_col = params["w2"].reshape(-1, 1).astype(jnp.float32)     # (neurons, 1)
    b2 = params["b2"].reshape(1, 1).astype(jnp.float32)          # SMEM scalar

    idx_spec = pl.BlockSpec((1, te), lambda i: (0, i))

    def resident(shape):
        return pl.BlockSpec(shape, lambda i: (0, 0))   # fetched once, reused

    in_specs = [
        idx_spec,                                      # row indices (1, E_pad)
        idx_spec,                                      # col indices (1, E_pad)
        resident(drug_t.shape),                        # drug table (bf16)
        resident(dis_t.shape),                         # disease table (bf16)
        *[resident(w.shape) for w in weight_args],     # W1 (split for concat)
        resident(b1_col.shape),                        # b1 column (f32)
        resident(w2_col.shape),                        # w2 column (f32)
        pl.BlockSpec(memory_space=pltpu.MemorySpace.SMEM),   # b2 scalar
    ]

    kernel = functools.partial(_linears_kernel, aggregator=aggregator)

    out = pl.pallas_call(
        kernel,
        out_shape=jax.ShapeDtypeStruct((1, E_pad), jnp.float32),
        grid_spec=pltpu.PrefetchScalarGridSpec(
            num_scalar_prefetch=0,
            grid=(E_pad // te,),
            in_specs=in_specs,
            out_specs=pl.BlockSpec((1, te), lambda i: (0, i)),
        ),
        compiler_params=pltpu.CompilerParams(
            dimension_semantics=("parallel",)),
    )(row2d, col2d, drug_t, dis_t, *weight_args, b1_col, w2_col, b2)

    return out.reshape(-1)[:E]


def init_params(key, neurons, aggregator):
    """Deterministic synthetic parameters matching the PyTorch module shapes."""
    k1, k2, k3, k4 = jax.random.split(key, 4)
    in_features = 2 * neurons if aggregator == "concatenate" else neurons
    # W1 stored as (in_features, neurons) (transposed vs torch's (out, in)).
    w1 = jax.random.normal(k1, (in_features, neurons), jnp.float32) * 0.1
    b1 = jax.random.normal(k2, (1, neurons), jnp.float32) * 0.1
    w2 = jax.random.normal(k3, (neurons, 1), jnp.float32) * 0.1
    b2 = jax.random.normal(k4, (1, 1), jnp.float32) * 0.1
    p = {"b1": b1, "w2": w2, "b2": b2, "w1_full": w1}
    if aggregator == "concatenate":
        p["w1a"], p["w1b"] = w1[:neurons], w1[neurons:]
    else:
        p["w1a"] = w1
    return p


def reference_forward(z_drug, z_disease, edge_label_index, params, aggregator):
    row, col = edge_label_index[0], edge_label_index[1]
    d, s = z_drug[row], z_disease[col]
    if aggregator == "concatenate":
        z = jnp.concatenate([d, s], axis=-1)
    elif aggregator == "mean":
        z = (d + s) / 2
    elif aggregator == "sum":
        z = d + s
    else:
        z = d * s
    h = jnp.maximum(z @ params["w1_full"] + params["b1"], 0.0)
    return (h @ params["w2"] + params["b2"]).reshape(-1)


if __name__ == "__main__":
    neurons = 32
    num_drugs, num_diseases = 10, 12
    E = 300                      # small demo; index padding happens inside

    key = jax.random.PRNGKey(0)
    kd, ks, kr, kc, kp = jax.random.split(key, 5)
    z_drug = jax.random.normal(kd, (num_drugs, neurons), jnp.float32)
    z_disease = jax.random.normal(ks, (num_diseases, neurons), jnp.float32)
    edge_label_index = jnp.stack([
        jax.random.randint(kr, (E,), 0, num_drugs, dtype=jnp.int32),
        jax.random.randint(kc, (E,), 0, num_diseases, dtype=jnp.int32),
    ])

    fwd = jax.jit(linears_forward,
                  static_argnames=("aggregator", "edge_tile", "activation_dtype"))

    ok = True
    for aggregator in ("concatenate", "mean", "sum", "mul"):
        params = init_params(kp, neurons, aggregator)
        out = fwd(z_drug, z_disease, edge_label_index, params,
                  aggregator=aggregator)
        out = jax.block_until_ready(out)
        ref = reference_forward(z_drug, z_disease, edge_label_index, params,
                                aggregator)
        # bf16 transport of tables / W1 vs. the f32 reference -> loose tolerance
        # (explicit accuracy decision, per the review).
        if not jnp.allclose(out, ref, atol=5e-2, rtol=5e-2):
            ok = False
            print(f"MISMATCH for aggregator={aggregator}: "
                  f"max abs diff {jnp.max(jnp.abs(out - ref))}")

    if ok:
        print("KERNEL_OK")
</pallas_src>

<mosaic_0001>
module attributes {stable_mosaic.version = 11 : i64} {
  func.func @_linears_kernel(%arg0: i32, %arg1: memref<1x256xi32, #tpu.memory_space<vmem>>, %arg2: memref<1x256xi32, #tpu.memory_space<vmem>>, %arg3: memref<32x16xbf16, #tpu.memory_space<vmem>>, %arg4: memref<32x16xbf16, #tpu.memory_space<vmem>>, %arg5: memref<32x32xbf16, #tpu.memory_space<vmem>>, %arg6: memref<32x32xbf16, #tpu.memory_space<vmem>>, %arg7: memref<32x1xf32, #tpu.memory_space<vmem>>, %arg8: memref<32x1xf32, #tpu.memory_space<vmem>>, %arg9: memref<1x1xf32, #tpu.memory_space<smem>>, %arg10: memref<1x256xf32, #tpu.memory_space<vmem>>) attributes {dimension_semantics = [#tpu.dimension_semantics<parallel>], iteration_bounds = array<i64: 2>, scalar_prefetch = 0 : i64, scratch_operands = 0 : i64, tpu.core_type = #tpu.core_type<tc>, window_params = [{transform_indices = @transform_0, window_bounds = array<i64: 1, 256>}, {transform_indices = @transform_1, window_bounds = array<i64: 1, 256>}, {pipeline_mode = #tpu.pipeline_mode<synchronous>, transform_indices = @transform_2, window_bounds = array<i64: 32, 16>}, {pipeline_mode = #tpu.pipeline_mode<synchronous>, transform_indices = @transform_3, window_bounds = array<i64: 32, 16>}, {pipeline_mode = #tpu.pipeline_mode<synchronous>, transform_indices = @transform_4, window_bounds = array<i64: 32, 32>}, {pipeline_mode = #tpu.pipeline_mode<synchronous>, transform_indices = @transform_5, window_bounds = array<i64: 32, 32>}, {pipeline_mode = #tpu.pipeline_mode<synchronous>, transform_indices = @transform_6, window_bounds = array<i64: 32, 1>}, {pipeline_mode = #tpu.pipeline_mode<synchronous>, transform_indices = @transform_7, window_bounds = array<i64: 32, 1>}, {transform_indices = @transform_8, window_bounds = array<i64: 1, 1>}, {transform_indices = @transform_9, window_bounds = array<i64: 1, 256>}]} {
    %c0 = arith.constant 0 : index
    %c0_0 = arith.constant 0 : index
    %0 = vector.load %arg1[%c0, %c0_0] : memref<1x256xi32, #tpu.memory_space<vmem>>, vector<1x256xi32>
    %c0_1 = arith.constant 0 : index
    %c0_2 = arith.constant 0 : index
    %1 = vector.load %arg2[%c0_1, %c0_2] : memref<1x256xi32, #tpu.memory_space<vmem>>, vector<1x256xi32>
    %2 = tpu.iota {dimensions = array<i32: 0>} : vector<16x256xi32>
    %3 = vector.broadcast %0 : vector<1x256xi32> to vector<16x256xi32>
    %4 = arith.cmpi eq, %2, %3 : vector<16x256xi32>
    %5 = arith.extui %4 : vector<16x256xi1> to vector<16x256xi32>
    %6 = arith.sitofp %5 : vector<16x256xi32> to vector<16x256xf32>
    %7 = arith.truncf %6 : vector<16x256xf32> to vector<16x256xbf16>
    %8 = tpu.iota {dimensions = array<i32: 0>} : vector<16x256xi32>
    %9 = vector.broadcast %1 : vector<1x256xi32> to vector<16x256xi32>
    %10 = arith.cmpi eq, %8, %9 : vector<16x256xi32>
    %11 = arith.extui %10 : vector<16x256xi1> to vector<16x256xi32>
    %12 = arith.sitofp %11 : vector<16x256xi32> to vector<16x256xf32>
    %13 = arith.truncf %12 : vector<16x256xf32> to vector<16x256xbf16>
    %c0_3 = arith.constant 0 : index
    %c0_4 = arith.constant 0 : index
    %14 = vector.load %arg3[%c0_3, %c0_4] : memref<32x16xbf16, #tpu.memory_space<vmem>>, vector<32x16xbf16>
    %cst = arith.constant dense<0.000000e+00> : vector<32x256xf32>
    %15 = tpu.matmul %14, %7, %cst {dimension_numbers = #tpu.dot_dimension_numbers<[1], [0], [0], [1], [0, 0, 1, 1], [], []>} : vector<32x16xbf16>, vector<16x256xbf16>, vector<32x256xf32> -> vector<32x256xf32>
    %c0_5 = arith.constant 0 : index
    %c0_6 = arith.constant 0 : index
    %16 = vector.load %arg4[%c0_5, %c0_6] : memref<32x16xbf16, #tpu.memory_space<vmem>>, vector<32x16xbf16>
    %cst_7 = arith.constant dense<0.000000e+00> : vector<32x256xf32>
    %17 = tpu.matmul %16, %13, %cst_7 {dimension_numbers = #tpu.dot_dimension_numbers<[1], [0], [0], [1], [0, 0, 1, 1], [], []>} : vector<32x16xbf16>, vector<16x256xbf16>, vector<32x256xf32> -> vector<32x256xf32>
    %c0_8 = arith.constant 0 : index
    %c0_9 = arith.constant 0 : index
    %18 = vector.load %arg5[%c0_8, %c0_9] : memref<32x32xbf16, #tpu.memory_space<vmem>>, vector<32x32xbf16>
    %19 = arith.truncf %15 : vector<32x256xf32> to vector<32x256xbf16>
    %cst_10 = arith.constant dense<0.000000e+00> : vector<32x256xf32>
    %20 = tpu.matmul %18, %19, %cst_10 {dimension_numbers = #tpu.dot_dimension_numbers<[1], [0], [0], [1], [0, 0, 1, 1], [], []>} : vector<32x32xbf16>, vector<32x256xbf16>, vector<32x256xf32> -> vector<32x256xf32>
    %c0_11 = arith.constant 0 : index
    %c0_12 = arith.constant 0 : index
    %21 = vector.load %arg6[%c0_11, %c0_12] : memref<32x32xbf16, #tpu.memory_space<vmem>>, vector<32x32xbf16>
    %22 = arith.truncf %17 : vector<32x256xf32> to vector<32x256xbf16>
    %cst_13 = arith.constant dense<0.000000e+00> : vector<32x256xf32>
    %23 = tpu.matmul %21, %22, %cst_13 {dimension_numbers = #tpu.dot_dimension_numbers<[1], [0], [0], [1], [0, 0, 1, 1], [], []>} : vector<32x32xbf16>, vector<32x256xbf16>, vector<32x256xf32> -> vector<32x256xf32>
    %24 = arith.addf %20, %23 : vector<32x256xf32>
    %c0_14 = arith.constant 0 : index
    %c0_15 = arith.constant 0 : index
    %25 = vector.load %arg7[%c0_14, %c0_15] : memref<32x1xf32, #tpu.memory_space<vmem>>, vector<32x1xf32>
    %26 = vector.broadcast %25 : vector<32x1xf32> to vector<32x256xf32>
    %27 = arith.addf %24, %26 : vector<32x256xf32>
    %cst_16 = arith.constant 0.000000e+00 : f32
    %28 = vector.broadcast %cst_16 : f32 to vector<32x256xf32>
    %29 = arith.maximumf %27, %28 : vector<32x256xf32>
    %c0_17 = arith.constant 0 : index
    %c0_18 = arith.constant 0 : index
    %30 = vector.load %arg8[%c0_17, %c0_18] : memref<32x1xf32, #tpu.memory_space<vmem>>, vector<32x1xf32>
    %31 = vector.broadcast %30 : vector<32x1xf32> to vector<32x256xf32>
    %32 = arith.mulf %29, %31 : vector<32x256xf32>
    %cst_19 = arith.constant dense<0.000000e+00> : vector<256xf32>
    %33 = vector.multi_reduction <add>, %32, %cst_19 [0] : vector<32x256xf32> to vector<256xf32>
    %34 = vector.shape_cast %33 : vector<256xf32> to vector<1x256xf32>
    %c0_20 = arith.constant 0 : index
    %c0_21 = arith.constant 0 : index
    %35 = memref.load %arg9[%c0_20, %c0_21] : memref<1x1xf32, #tpu.memory_space<smem>>
    %36 = vector.broadcast %35 : f32 to vector<1x256xf32>
    %37 = arith.addf %34, %36 : vector<1x256xf32>
    %c0_22 = arith.constant 0 : index
    %c0_23 = arith.constant 0 : index
    %38 = vector.load %arg10[%c0_22, %c0_23] : memref<1x256xf32, #tpu.memory_space<vmem>>, vector<1x256xf32>
    tpu.vector_store %arg10[%c0_22, %c0_23], %37 {strides = array<i32>} : memref<1x256xf32, #tpu.memory_space<vmem>>, vector<1x256xf32>,
    return
  }
  func.func @transform_0(%arg0: i32) -> (i32, i32) {
    %c0_i32 = arith.constant 0 : i32
    %c0_i32_0 = arith.constant 0 : i32
    return %c0_i32, %arg0 : i32, i32
  }
  func.func @transform_1(%arg0: i32) -> (i32, i32) {
    %c0_i32 = arith.constant 0 : i32
    %c0_i32_0 = arith.constant 0 : i32
    return %c0_i32, %arg0 : i32, i32
  }
  func.func @transform_2(%arg0: i32) -> (i32, i32) {
    %c0_i32 = arith.constant 0 : i32
    %c0_i32_0 = arith.constant 0 : i32
    %c0_i32_1 = arith.constant 0 : i32
    return %c0_i32, %c0_i32_0 : i32, i32
  }
  func.func @transform_3(%arg0: i32) -> (i32, i32) {
    %c0_i32 = arith.constant 0 : i32
    %c0_i32_0 = arith.constant 0 : i32
    %c0_i32_1 = arith.constant 0 : i32
    return %c0_i32, %c0_i32_0 : i32, i32
  }
  func.func @transform_4(%arg0: i32) -> (i32, i32) {
    %c0_i32 = arith.constant 0 : i32
    %c0_i32_0 = arith.constant 0 : i32
    %c0_i32_1 = arith.constant 0 : i32
    return %c0_i32, %c0_i32_0 : i32, i32
  }
  func.func @transform_5(%arg0: i32) -> (i32, i32) {
    %c0_i32 = arith.constant 0 : i32
    %c0_i32_0 = arith.constant 0 : i32
    %c0_i32_1 = arith.constant 0 : i32
    return %c0_i32, %c0_i32_0 : i32, i32
  }
  func.func @transform_6(%arg0: i32) -> (i32, i32) {
    %c0_i32 = arith.constant 0 : i32
    %c0_i32_0 = arith.constant 0 : i32
    %c0_i32_1 = arith.constant 0 : i32
    return %c0_i32, %c0_i32_0 : i32, i32
  }
  func.func @transform_7(%arg0: i32) -> (i32, i32) {
    %c0_i32 = arith.constant 0 : i32
    %c0_i32_0 = arith.constant 0 : i32
    %c0_i32_1 = arith.constant 0 : i32
    return %c0_i32, %c0_i32_0 : i32, i32
  }
  func.func @transform_8(%arg0: i32) -> (i32, i32) {
    %c0_i32 = arith.constant 0 : i32
    %c0_i32_0 = arith.constant 0 : i32
    %c0_i32_1 = arith.constant 0 : i32
    return %c0_i32, %c0_i32_0 : i32, i32
  }
  func.func @transform_9(%arg0: i32) -> (i32, i32) {
    %c0_i32 = arith.constant 0 : i32
    %c0_i32_0 = arith.constant 0 : i32
    return %c0_i32, %arg0 : i32, i32
  }
}

</mosaic_0001>

<llo_original>
// kernel: linears_forward.1
$region0: #{linears_forward.1}
  #allocation0 [shape = 'u32[]', space=smem, size = 0x4, offset = 0x4, fixed_abs, tag = 'smem constant byte address 0x4 - core index']
  #allocation1 [shape = 'u32[144,128]{1,0:T(1,128)}', space=vmem, size = 0x12000, scoped, tag = 'internal scratch']
  #allocation2 [shape = 'f32[1,1]{1,0:T(1,128)S(6)}', space=smem, size = 0x200, scoped, tag = 'scoped memory for linears_forward.1']
  %s0 = inlined_call_operand.vmem [shape: s32[1,512], index: 0, kind: input, shape index: {}]
  %s1 = inlined_call_operand.vmem [shape: s32[1,512], index: 1, kind: input, shape index: {}]
  %s2 = inlined_call_operand.vmem [shape: bf16[32,16], index: 2, kind: input, shape index: {}]
  %s3 = inlined_call_operand.vmem [shape: bf16[32,16], index: 3, kind: input, shape index: {}]
  %s4 = inlined_call_operand.vmem [shape: bf16[32,32], index: 4, kind: input, shape index: {}]
  %s5 = inlined_call_operand.vmem [shape: bf16[32,32], index: 5, kind: input, shape index: {}]
  %s6 = inlined_call_operand.vmem [shape: f32[32,1], index: 6, kind: input, shape index: {}]
  %s7 = inlined_call_operand.vmem [shape: f32[32,1], index: 7, kind: input, shape index: {}]
  %s8 = inlined_call_operand.<no memory space> [shape: f32[1,1], index: 8, kind: input, shape index: {}]
  %s9 = inlined_call_operand.vmem [shape: f32[1,512], index: 9, kind: output, shape index: {}]
  %s10 = sld [smem:[#allocation0]]
  $region69: #{linears_forward.1} parent=0
    _
  %s12 = ssub.s32 1, %s10
  %s13 = scalar_select 0, %s12, %s10
  %14 = sst [smem:[#allocation2]] %s8
  loop: start=0, step=1, limit=4
  $region2: #{linears_forward.1} parent=0 // loop_pre_header
    _
  $region3: #{linears_forward.1} parent=0 // loop_header
    %s16 = sphi 0, %s20
    %p17 = scmp.ge.s32.totalorder %s16, 4
    %s26 = sphi 0, %s28
    %s29 = sphi 0, %s26
    %s30 = sphi 0, %s29
    %s46 = sphi 0, %s30
    %s52 = sphi 0, %s54
    %s55 = sphi 0, %s52
    %s56 = sphi 0, %s55
    %s72 = sphi 0, %s56
    %s76 = sphi 0, %s76
    %s78 = sphi 0, %s76
    %s79 = sphi 0, %s78
    %s93 = sphi 0, %s79
    %s97 = sphi 0, %s97
    %s99 = sphi 0, %s97
    %s100 = sphi 0, %s99
    %s114 = sphi 0, %s100
    %s118 = sphi 0, %s118
    %s120 = sphi 0, %s118
    %s121 = sphi 0, %s120
    %s135 = sphi 0, %s121
    %s139 = sphi 0, %s139
    %s141 = sphi 0, %s139
    %s142 = sphi 0, %s141
    %s156 = sphi 0, %s142
    %s160 = sphi 0, %s160
    %s162 = sphi 0, %s160
    %s163 = sphi 0, %s162
    %s177 = sphi 0, %s163
    %s181 = sphi 0, %s181
    %s183 = sphi 0, %s181
    %s184 = sphi 0, %s183
    %s198 = sphi 0, %s184
    %s202 = sphi 0, %s202
    %s204 = sphi 0, %s202
    %s205 = sphi 0, %s204
    %s219 = sphi 0, %s205
    %s225 = sphi 0, %s227
    %s228 = sphi 0, %s225
    %s229 = sphi 0, %s228
    %s245 = sphi 0, %s229
  $region4: #{linears_forward.1} parent=0 // loop_header_branch
    %19 = sbr.rel (%p17) target = $region8
  $region5: #{linears_forward.1} parent=0 // loop_body
    %s21 = ssub.s32 %s16, 1
    %s22 = ssub.s32 %s16, 2
    %s23 = sadd.s32 %s16, 1
    %s24 = ssub.s32 %s16, %s23
    %p25 = scmp.eq.s32.totalorder %s24, 0
    %s27 = sadd.s32 %s26, 1
    %s28 = scalar_select %p25, %s26, %s27
    %p31 = pneg %p25
    %p32 = scmp.eq.s32.totalorder %s16, 1
    %p33 = por %p31, %p32
    %p34 = scmp.ne.s32.totalorder %s26, %s29
    %p35 = scmp.eq.s32.totalorder %s16, 0
    %p36 = por %p34, %p35
    %p37 = scmp.ne.s32.totalorder %s26, %s29
    %p38 = scmp.eq.s32.totalorder %s21, 1
    %p39 = por %p37, %p38
    %p40 = scmp.ne.s32.totalorder %s29, %s30
    %p41 = scmp.eq.s32.totalorder %s21, 0
    %p42 = por %p40, %p41
    %p43 = scmp.ne.s32.totalorder %s29, %s30
    %p44 = scmp.eq.s32.totalorder %s22, 1
    %p45 = por %p43, %p44
    %p47 = scmp.ne.s32.totalorder %s30, %s46
    %p48 = scmp.eq.s32.totalorder %s22, 0
    %p49 = por %p47, %p48
    %s50 = ssub.s32 %s16, %s23
    %p51 = scmp.eq.s32.totalorder %s50, 0
    %s53 = sadd.s32 %s52, 1
    %s54 = scalar_select %p51, %s52, %s53
    %p57 = pneg %p51
    %p58 = scmp.eq.s32.totalorder %s16, 1
    %p59 = por %p57, %p58
    %p60 = scmp.ne.s32.totalorder %s52, %s55
    %p61 = scmp.eq.s32.totalorder %s16, 0
    %p62 = por %p60, %p61
    %p63 = scmp.ne.s32.totalorder %s52, %s55
    %p64 = scmp.eq.s32.totalorder %s21, 1
    %p65 = por %p63, %p64
    %p66 = scmp.ne.s32.totalorder %s55, %s56
    %p67 = scmp.eq.s32.totalorder %s21, 0
    %p68 = por %p66, %p67
    %p69 = scmp.ne.s32.totalorder %s55, %s56
    %p70 = scmp.eq.s32.totalorder %s22, 1
    %p71 = por %p69, %p70
    %p73 = scmp.ne.s32.totalorder %s56, %s72
    %p74 = scmp.eq.s32.totalorder %s22, 0
    %p75 = por %p73, %p74
    %s77 = sadd.s32 %s76, 1
    %p80 = scmp.eq.s32.totalorder %s16, 1
    %p81 = scmp.ne.s32.totalorder %s76, %s78
    %p82 = scmp.eq.s32.totalorder %s16, 0
    %p83 = por %p81, %p82
    %p84 = scmp.ne.s32.totalorder %s76, %s78
    %p85 = scmp.eq.s32.totalorder %s21, 1
    %p86 = por %p84, %p85
    %p87 = scmp.ne.s32.totalorder %s78, %s79
    %p88 = scmp.eq.s32.totalorder %s21, 0
    %p89 = por %p87, %p88
    %p90 = scmp.ne.s32.totalorder %s78, %s79
    %p91 = scmp.eq.s32.totalorder %s22, 1
    %p92 = por %p90, %p91
    %p94 = scmp.ne.s32.totalorder %s79, %s93
    %p95 = scmp.eq.s32.totalorder %s22, 0
    %p96 = por %p94, %p95
    %s98 = sadd.s32 %s97, 1
    %p101 = scmp.eq.s32.totalorder %s16, 1
    %p102 = scmp.ne.s32.totalorder %s97, %s99
    %p103 = scmp.eq.s32.totalorder %s16, 0
    %p104 = por %p102, %p103
    %p105 = scmp.ne.s32.totalorder %s97, %s99
    %p106 = scmp.eq.s32.totalorder %s21, 1
    %p107 = por %p105, %p106
    %p108 = scmp.ne.s32.totalorder %s99, %s100
    %p109 = scmp.eq.s32.totalorder %s21, 0
    %p110 = por %p108, %p109
    %p111 = scmp.ne.s32.totalorder %s99, %s100
    %p112 = scmp.eq.s32.totalorder %s22, 1
    %p113 = por %p111, %p112
    %p115 = scmp.ne.s32.totalorder %s100, %s114
    %p116 = scmp.eq.s32.totalorder %s22, 0
    %p117 = por %p115, %p116
    %s119 = sadd.s32 %s118, 1
    %p122 = scmp.eq.s32.totalorder %s16, 1
    %p123 = scmp.ne.s32.totalorder %s118, %s120
    %p124 = scmp.eq.s32.totalorder %s16, 0
    %p125 = por %p123, %p124
    %p126 = scmp.ne.s32.totalorder %s118, %s120
    %p127 = scmp.eq.s32.totalorder %s21, 1
    %p128 = por %p126, %p127
    %p129 = scmp.ne.s32.totalorder %s120, %s121
    %p130 = scmp.eq.s32.totalorder %s21, 0
    %p131 = por %p129, %p130
    %p132 = scmp.ne.s32.totalorder %s120, %s121
    %p133 = scmp.eq.s32.totalorder %s22, 1
    %p134 = por %p132, %p133
    %p136 = scmp.ne.s32.totalorder %s121, %s135
    %p137 = scmp.eq.s32.totalorder %s22, 0
    %p138 = por %p136, %p137
    %s140 = sadd.s32 %s139, 1
    %p143 = scmp.eq.s32.totalorder %s16, 1
    %p144 = scmp.ne.s32.totalorder %s139, %s141
    %p145 = scmp.eq.s32.totalorder %s16, 0
    %p146 = por %p144, %p145
    %p147 = scmp.ne.s32.totalorder %s139, %s141
    %p148 = scmp.eq.s32.totalorder %s21, 1
    %p149 = por %p147, %p148
    %p150 = scmp.ne.s32.totalorder %s141, %s142
    %p151 = scmp.eq.s32.totalorder %s21, 0
    %p152 = por %p150, %p151
    %p153 = scmp.ne.s32.totalorder %s141, %s142
    %p154 = scmp.eq.s32.totalorder %s22, 1
    %p155 = por %p153, %p154
    %p157 = scmp.ne.s32.totalorder %s142, %s156
    %p158 = scmp.eq.s32.totalorder %s22, 0
    %p159 = por %p157, %p158
    %s161 = sadd.s32 %s160, 1
    %p164 = scmp.eq.s32.totalorder %s16, 1
    %p165 = scmp.ne.s32.totalorder %s160, %s162
    %p166 = scmp.eq.s32.totalorder %s16, 0
    %p167 = por %p165, %p166
    %p168 = scmp.ne.s32.totalorder %s160, %s162
    %p169 = scmp.eq.s32.totalorder %s21, 1
    %p170 = por %p168, %p169
    %p171 = scmp.ne.s32.totalorder %s162, %s163
    %p172 = scmp.eq.s32.totalorder %s21, 0
    %p173 = por %p171, %p172
    %p174 = scmp.ne.s32.totalorder %s162, %s163
    %p175 = scmp.eq.s32.totalorder %s22, 1
    %p176 = por %p174, %p175
    %p178 = scmp.ne.s32.totalorder %s163, %s177
    %p179 = scmp.eq.s32.totalorder %s22, 0
    %p180 = por %p178, %p179
    %s182 = sadd.s32 %s181, 1
    %p185 = scmp.eq.s32.totalorder %s16, 1
    %p186 = scmp.ne.s32.totalorder %s181, %s183
    %p187 = scmp.eq.s32.totalorder %s16, 0
    %p188 = por %p186, %p187
    %p189 = scmp.ne.s32.totalorder %s181, %s183
    %p190 = scmp.eq.s32.totalorder %s21, 1
    %p191 = por %p189, %p190
    %p192 = scmp.ne.s32.totalorder %s183, %s184
    %p193 = scmp.eq.s32.totalorder %s21, 0
    %p194 = por %p192, %p193
    %p195 = scmp.ne.s32.totalorder %s183, %s184
    %p196 = scmp.eq.s32.totalorder %s22, 1
    %p197 = por %p195, %p196
    %p199 = scmp.ne.s32.totalorder %s184, %s198
    %p200 = scmp.eq.s32.totalorder %s22, 0
    %p201 = por %p199, %p200
    %s203 = sadd.s32 %s202, 1
    %p206 = scmp.eq.s32.totalorder %s16, 1
    %p207 = scmp.ne.s32.totalorder %s202, %s204
    %p208 = scmp.eq.s32.totalorder %s16, 0
    %p209 = por %p207, %p208
    %p210 = scmp.ne.s32.totalorder %s202, %s204
    %p211 = scmp.eq.s32.totalorder %s21, 1
    %p212 = por %p210, %p211
    %p213 = scmp.ne.s32.totalorder %s204, %s205
    %p214 = scmp.eq.s32.totalorder %s21, 0
    %p215 = por %p213, %p214
    %p216 = scmp.ne.s32.totalorder %s204, %s205
    %p217 = scmp.eq.s32.totalorder %s22, 1
    %p218 = por %p216, %p217
    %p220 = scmp.ne.s32.totalorder %s205, %s219
    %p221 = scmp.eq.s32.totalorder %s22, 0
    %p222 = por %p220, %p221
    %s223 = ssub.s32 %s16, %s23
    %p224 = scmp.eq.s32.totalorder %s223, 0
    %s226 = sadd.s32 %s225, 1
    %s227 = scalar_select %p224, %s225, %s226
    %p230 = pneg %p224
    %p231 = scmp.eq.s32.totalorder %s16, 1
    %p232 = por %p230, %p231
    %p233 = scmp.ne.s32.totalorder %s225, %s228
    %p234 = scmp.eq.s32.totalorder %s16, 0
    %p235 = por %p233, %p234
    %p236 = scmp.ne.s32.totalorder %s225, %s228
    %p237 = scmp.eq.s32.totalorder %s21, 1
    %p238 = por %p236, %p237
    %p239 = scmp.ne.s32.totalorder %s228, %s229
    %p240 = scmp.eq.s32.totalorder %s21, 0
    %p241 = por %p239, %p240
    %p242 = scmp.ne.s32.totalorder %s228, %s229
    %p243 = scmp.eq.s32.totalorder %s22, 1
    %p244 = por %p242, %p243
    %p246 = scmp.ne.s32.totalorder %s229, %s245
    %p247 = scmp.eq.s32.totalorder %s22, 0
    %p248 = por %p246, %p247
    %p249 = scmp.le.s32.totalorder 1, %s16
    %p250 = scmp.lt.s32.totalorder %s16, 3
    %p251 = pnand %p249, %p250
    %p252 = pneg %p251
    // Predicated region
    $region9: #{linears_forward.1} parent=5 // pred_check
      _
    $region10: #{linears_forward.1} parent=5 // pred_check_branch
      %254 = sbr.rel (%p251) target = $region12
    $region11: #{linears_forward.1} parent=5 // pred_region
      %s255 = ssub.s32 %s16, 1
      // Predicated region
      $region13: #{linears_forward.1} parent=11 // pred_check
        %p256 = pneg %p89
      $region14: #{linears_forward.1} parent=11 // pred_check_branch
        %258 = sbr.rel (%p256) target = $region16
      $region15: #{linears_forward.1} parent=11 // pred_region
        _
      $region16: #{linears_forward.1} parent=11 // pred_fallthru
        _
      // Predicated region
      $region17: #{linears_forward.1} parent=11 // pred_check
        %p259 = pneg %p110
      $region18: #{linears_forward.1} parent=11 // pred_check_branch
        %261 = sbr.rel (%p259) target = $region20
      $region19: #{linears_forward.1} parent=11 // pred_region
        _
      $region20: #{linears_forward.1} parent=11 // pred_fallthru
        _
      // Predicated region
      $region21: #{linears_forward.1} parent=11 // pred_check
        %p262 = pneg %p131
      $region22: #{linears_forward.1} parent=11 // pred_check_branch
        %264 = sbr.rel (%p262) target = $region24
      $region23: #{linears_forward.1} parent=11 // pred_region
        _
      $region24: #{linears_forward.1} parent=11 // pred_fallthru
        _
      // Predicated region
      $region25: #{linears_forward.1} parent=11 // pred_check
        %p265 = pneg %p152
      $region26: #{linears_forward.1} parent=11 // pred_check_branch
        %267 = sbr.rel (%p265) target = $region28
      $region27: #{linears_forward.1} parent=11 // pred_region
        _
      $region28: #{linears_forward.1} parent=11 // pred_fallthru
        _
      // Predicated region
      $region29: #{linears_forward.1} parent=11 // pred_check
        %p268 = pneg %p173
      $region30: #{linears_forward.1} parent=11 // pred_check_branch
        %270 = sbr.rel (%p268) target = $region32
      $region31: #{linears_forward.1} parent=11 // pred_region
        _
      $region32: #{linears_forward.1} parent=11 // pred_fallthru
        _
      // Predicated region
      $region33: #{linears_forward.1} parent=11 // pred_check
        %p271 = pneg %p194
      $region34: #{linears_forward.1} parent=11 // pred_check_branch
        %273 = sbr.rel (%p271) target = $region36
      $region35: #{linears_forward.1} parent=11 // pred_region
        _
      $region36: #{linears_forward.1} parent=11 // pred_fallthru
        _
      // Predicated region
      $region37: #{linears_forward.1} parent=11 // pred_check
        %p274 = pneg %p215
      $region38: #{linears_forward.1} parent=11 // pred_check_branch
        %276 = sbr.rel (%p274) target = $region40
      $region39: #{linears_forward.1} parent=11 // pred_region
        _
      $region40: #{linears_forward.1} parent=11 // pred_fallthru
        _
    $region12: #{linears_forward.1} parent=5 // pred_fallthru
      _
    %p277 = scmp.lt.s32.totalorder %s16, 2
    // Predicated region
    $region41: #{linears_forward.1} parent=5 // pred_check
      %p278 = pneg %p277
    $region42: #{linears_forward.1} parent=5 // pred_check_branch
      %280 = sbr.rel (%p278) target = $region44
    $region43: #{linears_forward.1} parent=5 // pred_region
      // Predicated region
      $region45: #{linears_forward.1} parent=43 // pred_check
        %p281 = pneg %p36
      $region46: #{linears_forward.1} parent=43 // pred_check_branch
        %283 = sbr.rel (%p281) target = $region48
      $region47: #{linears_forward.1} parent=43 // pred_region
        %s284 = smul.u32 2, %s16
        %p285 = scmp.lt.s32.totalorder %s284, 3
        %s286 = scalar_select %p285, %s284, 3
        %s287 = scalar_lea.vmem %s0, %s286
        %s288 = smul.u32 2, %s16
      $region48: #{linears_forward.1} parent=43 // pred_fallthru
        _
      // Predicated region
      $region49: #{linears_forward.1} parent=43 // pred_check
        %p289 = pneg %p62
      $region50: #{linears_forward.1} parent=43 // pred_check_branch
        %291 = sbr.rel (%p289) target = $region52
      $region51: #{linears_forward.1} parent=43 // pred_region
        %s292 = smul.u32 2, %s16
        %p293 = scmp.lt.s32.totalorder %s292, 3
        %s294 = scalar_select %p293, %s292, 3
        %s295 = scalar_lea.vmem %s1, %s294
        %s296 = smul.u32 2, %s16
      $region52: #{linears_forward.1} parent=43 // pred_fallthru
        _
    $region44: #{linears_forward.1} parent=5 // pred_fallthru
      _
    %p297 = scmp.le.s32.totalorder 1, %s16
    %p298 = scmp.lt.s32.totalorder %s16, 3
    %p299 = pnand %p297, %p298
    %p300 = pneg %p299
    // Predicated region
    $region53: #{linears_forward.1} parent=5 // pred_check
      _
    $region54: #{linears_forward.1} parent=5 // pred_check_branch
      %302 = sbr.rel (%p299) target = $region56
    $region55: #{linears_forward.1} parent=5 // pred_region
      %s303 = ssub.s32 %s16, 1
      %s304 = smul.u32 2, %s21
      %p305 = scmp.lt.s32.totalorder %s304, 3
      %s306 = scalar_select %p305, %s304, 3
      %s307 = scalar_lea.vmem %s0, %s306
      %p308 = pneg %p42
      %p309 = pneg %p39
      %s310 = smul.u32 2, %s21
      %p311 = scmp.lt.s32.totalorder %s310, 3
      %s312 = scalar_select %p311, %s310, 3
      %s313 = scalar_lea.vmem %s1, %s312
      %p314 = pneg %p68
      %p315 = pneg %p65
      %p316 = pneg %p89
      %p317 = pneg %p86
      %p318 = pneg %p110
      %p319 = pneg %p107
      %p320 = pneg %p131
      %p321 = pneg %p128
      %p322 = pneg %p152
      %p323 = pneg %p149
      %p324 = pneg %p173
      %p325 = pneg %p170
      %p326 = pneg %p194
      %p327 = pneg %p191
      %p328 = pneg %p215
      %p329 = pneg %p212
      %p330 = pneg %p241
      %p331 = pneg %p238
      %s332 = smul.u32 2, %s21
      %p333 = scmp.lt.s32.totalorder %s332, 3
      %s334 = scalar_select %p333, %s332, 3
      %s335 = scalar_lea.vmem %s9, %s334
      %s336 = smul.u32 2, %s21
      %p337 = scmp.lt.s32.totalorder %s336, 3
      %s338 = scalar_select %p337, %s336, 3
      %s339 = scalar_lea.vmem %s0, %s338
      %s340 = smul.u32 2, %s21
      %s341 = smul.u32 2, %s21
      %p342 = scmp.lt.s32.totalorder %s341, 3
      %s343 = scalar_select %p342, %s341, 3
      %s344 = scalar_lea.vmem %s1, %s343
      %s345 = smul.u32 2, %s21
      %s346 = smul.u32 2, %s21
      %p347 = scmp.lt.s32.totalorder %s346, 3
      %s348 = scalar_select %p347, %s346, 3
      %s349 = scalar_lea.vmem %s9, %s348
      %s350 = smul.u32 2, %s21
      %v352 = vld [vmem:[%s339] sm:$0x3]
      %v353 = vld [vmem:[%s344] sm:$0x3]
      %v354 = vlaneseq
      %v355 = vshrl.u32 %v354, 7
      %v356 = vadd.s32 %v355, 8
      %v357 = vlaneseq
      %v358 = vshrl.u32 %v357, 7
      %v359 = vsub.s32 0, %v358
      %v360 = vrot.slane %v352, %v359
      %v361 = vlaneseq
      %v362 = vshrl.u32 %v361, 7
      %v363 = vsub.s32 1, %v362
      %v364 = vrot.slane %v352, %v363
      %vm365 = vcmp.eq.s32.totalorder %v355, %v360
      %vm366 = vcmp.eq.s32.totalorder %v355, %v364
      %vm367 = vcmp.eq.s32.totalorder %v356, %v360
      %vm368 = vcmp.eq.s32.totalorder %v356, %v364
      %v369 = vsel %vm365, 1, 0
      %v370 = vsel %vm366, 1, 0
      %v371 = vsel %vm367, 1, 0
      %v372 = vsel %vm368, 1, 0
      %v373 = vcvt.s32.f32 %v369
      %v374 = vcvt.s32.f32 %v370
      %v375 = vcvt.s32.f32 %v371
      %v376 = vcvt.s32.f32 %v372
      %v377 = vpack.c.bf16 %v375, %v373
      %v378 = vpack.c.bf16 %v376, %v374
      %v379 = vlaneseq
      %v380 = vshrl.u32 %v379, 7
      %v381 = vsub.s32 0, %v380
      %v382 = vrot.slane %v353, %v381
      %v383 = vlaneseq
      %v384 = vshrl.u32 %v383, 7
      %v385 = vsub.s32 1, %v384
      %v386 = vrot.slane %v353, %v385
      %vm387 = vcmp.eq.s32.totalorder %v355, %v382
      %vm388 = vcmp.eq.s32.totalorder %v355, %v386
      %vm389 = vcmp.eq.s32.totalorder %v356, %v382
      %vm390 = vcmp.eq.s32.totalorder %v356, %v386
      %v391 = vsel %vm387, 1, 0
      %v392 = vsel %vm388, 1, 0
      %v393 = vsel %vm389, 1, 0
      %v394 = vsel %vm390, 1, 0
      %v395 = vcvt.s32.f32 %v391
      %v396 = vcvt.s32.f32 %v392
      %v397 = vcvt.s32.f32 %v393
      %v398 = vcvt.s32.f32 %v394
      %v399 = vpack.c.bf16 %v397, %v395
      %v400 = vpack.c.bf16 %v398, %v396
      %v401 = vld [vmem:[%s2] sm:$0xf]
      %v402 = vld [vmem:[%s2 + $0x4] sm:$0xf]
      %v403 = vld [vmem:[%s2 + $0x8] sm:$0xf]
      %v404 = vld [vmem:[%s2 + $0xc] sm:$0xf]
      %v409 = vunpack.c.l.b16 %v401
      %v410 = vunpack.c.l.b16 %v402
      %v411 = vunpack.c.l.b16 %v403
      %v412 = vunpack.c.l.b16 %v404
      %v413 = vpack.c.b16 %v410, %v409
      %v414 = vpack.c.b16 %v412, %v411
      %vm415 = vcmask 130048
      %v417 = vsel %vm415, %v413, 0
      %v420 = vsel %vm415, %v414, 0
      %422 = vmatprep.subr.bf16.mxu0 0
      %423 = vmatpush1.bf16.msra.mxu0 0
      %424 = vmatprep.subr.bf16.mxu0 0
      %425 = vmatpush1.bf16.msra.mxu0 0
      %426 = vmatprep.subr.bf16.mxu0 0
      %427 = vmatpush1.bf16.msra.mxu0 0
      %428 = vmatprep.subr.bf16.mxu0 0
      %429 = vmatpush1.bf16.msra.mxu0 0
      %430 = vmatprep.subr.bf16.mxu0 0
      %431 = vmatpush1.bf16.msra.mxu0 0
      %432 = vmatprep.subr.bf16.mxu0 0
      %433 = vmatpush1.bf16.msra.mxu0 0
      %434 = vmatprep.subr.bf16.mxu0 0
      %435 = vmatpush1.bf16.msra.mxu0 0
      %436 = vmatprep.subr.bf16.mxu0 %v378
      %437 = vmatpush1.bf16.msra.mxu0 %v377
      %438 = vmatprep.subr.bf16.mxu0 0
      %439 = vmatpush2.bf16.msra.mxu0 0
      %440 = vmatprep.subr.bf16.mxu0 0
      %441 = vmatpush2.bf16.msra.mxu0 0
      %442 = vmatprep.subr.bf16.mxu0 0
      %443 = vmatpush2.bf16.msra.mxu0 0
      %444 = vmatprep.subr.bf16.mxu0 0
      %445 = vmatpush2.bf16.msra.mxu0 0
      %446 = vmatprep.subr.bf16.mxu0 0
      %447 = vmatpush2.bf16.msra.mxu0 0
      %448 = vmatprep.subr.bf16.mxu0 0
      %449 = vmatpush2.bf16.msra.mxu0 0
      %450 = vmatprep.subr.bf16.mxu0 0
      %451 = vmatpush2.bf16.msra.mxu0 0
      %452 = vmatprep.subr.bf16.mxu0 0
      %453 = vmatpush2.bf16.msra.mxu0 0
      %454 = vmatprep.mubr.bf16.mxu0 0
      %455 = vmatmul.mubr.bf16.gmra.mxu0 %v417
      %v456 = vpop.f32.mrf.mxu0
      %v457 = vadd.f32 0.0, %v456
      %v458 = vpop.f32.mrf.mxu0
      %v459 = vadd.f32 0.0, %v458
      %v460 = vpop.f32.mrf.mxu0
      %v461 = vadd.f32 0.0, %v460
      %v462 = vpop.f32.mrf.mxu0
      %v463 = vadd.f32 0.0, %v462
      %464 = vmatprep.mubr.bf16.mxu0 0
      %465 = vmatmul.mubr.bf16.gmra.mxu0 %v420
      %v466 = vpop.f32.mrf.mxu0
      %v467 = vadd.f32 0.0, %v466
      %v468 = vpop.f32.mrf.mxu0
      %v469 = vadd.f32 0.0, %v468
      %v470 = vpop.f32.mrf.mxu0
      %v471 = vadd.f32 0.0, %v470
      %v472 = vpop.f32.mrf.mxu0
      %v473 = vadd.f32 0.0, %v472
      %474 = vdwg.mxu0
      %v475 = vld [vmem:[%s3] sm:$0xf]
      %v476 = vld [vmem:[%s3 + $0x4] sm:$0xf]
      %v477 = vld [vmem:[%s3 + $0x8] sm:$0xf]
      %v478 = vld [vmem:[%s3 + $0xc] sm:$0xf]
      %v483 = vunpack.c.l.b16 %v475
      %v484 = vunpack.c.l.b16 %v476
      %v485 = vunpack.c.l.b16 %v477
      %v486 = vunpack.c.l.b16 %v478
      %v487 = vpack.c.b16 %v484, %v483
      %v488 = vpack.c.b16 %v486, %v485
      %v490 = vsel %vm415, %v487, 0
      %v493 = vsel %vm415, %v488, 0
      %495 = vmatprep.subr.bf16.mxu0 0
      %496 = vmatpush1.bf16.msra.mxu0 0
      %497 = vmatprep.subr.bf16.mxu0 0
      %498 = vmatpush1.bf16.msra.mxu0 0
      %499 = vmatprep.subr.bf16.mxu0 0
      %500 = vmatpush1.bf16.msra.mxu0 0
      %501 = vmatprep.subr.bf16.mxu0 0
      %502 = vmatpush1.bf16.msra.mxu0 0
      %503 = vmatprep.subr.bf16.mxu0 0
      %504 = vmatpush1.bf16.msra.mxu0 0
      %505 = vmatprep.subr.bf16.mxu0 0
      %506 = vmatpush1.bf16.msra.mxu0 0
      %507 = vmatprep.subr.bf16.mxu0 0
      %508 = vmatpush1.bf16.msra.mxu0 0
      %509 = vmatprep.subr.bf16.mxu0 %v400
      %510 = vmatpush1.bf16.msra.mxu0 %v399
      %511 = vmatprep.subr.bf16.mxu0 0
      %512 = vmatpush2.bf16.msra.mxu0 0
      %513 = vmatprep.subr.bf16.mxu0 0
      %514 = vmatpush2.bf16.msra.mxu0 0
      %515 = vmatprep.subr.bf16.mxu0 0
      %516 = vmatpush2.bf16.msra.mxu0 0
      %517 = vmatprep.subr.bf16.mxu0 0
      %518 = vmatpush2.bf16.msra.mxu0 0
      %519 = vmatprep.subr.bf16.mxu0 0
      %520 = vmatpush2.bf16.msra.mxu0 0
      %521 = vmatprep.subr.bf16.mxu0 0
      %522 = vmatpush2.bf16.msra.mxu0 0
      %523 = vmatprep.subr.bf16.mxu0 0
      %524 = vmatpush2.bf16.msra.mxu0 0
      %525 = vmatprep.subr.bf16.mxu0 0
      %526 = vmatpush2.bf16.msra.mxu0 0
      %527 = vmatprep.mubr.bf16.mxu0 0
      %528 = vmatmul.mubr.bf16.gmra.mxu0 %v490
      %v529 = vpop.f32.mrf.mxu0
      %v530 = vadd.f32 0.0, %v529
      %v531 = vpop.f32.mrf.mxu0
      %v532 = vadd.f32 0.0, %v531
      %v533 = vpop.f32.mrf.mxu0
      %v534 = vadd.f32 0.0, %v533
      %v535 = vpop.f32.mrf.mxu0
      %v536 = vadd.f32 0.0, %v535
      %537 = vmatprep.mubr.bf16.mxu0 0
      %538 = vmatmul.mubr.bf16.gmra.mxu0 %v493
      %v539 = vpop.f32.mrf.mxu0
      %v540 = vadd.f32 0.0, %v539
      %v541 = vpop.f32.mrf.mxu0
      %v542 = vadd.f32 0.0, %v541
      %v543 = vpop.f32.mrf.mxu0
      %v544 = vadd.f32 0.0, %v543
      %v545 = vpop.f32.mrf.mxu0
      %v546 = vadd.f32 0.0, %v545
      %547 = vdwg.mxu0
      %v548 = vld [vmem:[%s4] sm:$0xf]
      %v549 = vld [vmem:[%s4 + $0x4] sm:$0xf]
      %v550 = vld [vmem:[%s4 + $0x8] sm:$0xf]
      %v551 = vld [vmem:[%s4 + $0xc] sm:$0xf]
      %v552 = vpack.c.bf16 %v461, %v457
      %v553 = vpack.c.bf16 %v463, %v459
      %v554 = vpack.c.bf16 %v471, %v467
      %v555 = vpack.c.bf16 %v473, %v469
      %v556 = vld [vmem:[%s5] sm:$0xf]
      %v557 = vld [vmem:[%s5 + $0x4] sm:$0xf]
      %v558 = vld [vmem:[%s5 + $0x8] sm:$0xf]
      %v559 = vld [vmem:[%s5 + $0xc] sm:$0xf]
      %v560 = vpack.c.bf16 %v534, %v530
      %v561 = vpack.c.bf16 %v536, %v532
      %v562 = vpack.c.bf16 %v544, %v540
      %v563 = vpack.c.bf16 %v546, %v542
      %v568 = vunpack.c.l.b16 %v556
      %v569 = vunpack.c.l.b16 %v557
      %v570 = vunpack.c.l.b16 %v558
      %v571 = vunpack.c.l.b16 %v559
      %v572 = vpack.c.b16 %v569, %v568
      %v573 = vpack.c.b16 %v571, %v570
      %vm574 = vcmask 261120
      %v576 = vsel %vm574, %v572, 0
      %v579 = vsel %vm574, %v573, 0
      %581 = vmatprep.subr.bf16.mxu0 0
      %582 = vmatpush1.bf16.msra.mxu0 0
      %583 = vmatprep.subr.bf16.mxu0 0
      %584 = vmatpush1.bf16.msra.mxu0 0
      %585 = vmatprep.subr.bf16.mxu0 0
      %586 = vmatpush1.bf16.msra.mxu0 0
      %587 = vmatprep.subr.bf16.mxu0 0
      %588 = vmatpush1.bf16.msra.mxu0 0
      %589 = vmatprep.subr.bf16.mxu0 0
      %590 = vmatpush1.bf16.msra.mxu0 0
      %591 = vmatprep.subr.bf16.mxu0 0
      %592 = vmatpush1.bf16.msra.mxu0 0
      %593 = vmatprep.subr.bf16.mxu0 %v563
      %594 = vmatpush1.bf16.msra.mxu0 %v562
      %595 = vmatprep.subr.bf16.mxu0 %v561
      %596 = vmatpush1.bf16.msra.mxu0 %v560
      %597 = vmatprep.subr.bf16.mxu0 0
      %598 = vmatpush2.bf16.msra.mxu0 0
      %599 = vmatprep.subr.bf16.mxu0 0
      %600 = vmatpush2.bf16.msra.mxu0 0
      %601 = vmatprep.subr.bf16.mxu0 0
      %602 = vmatpush2.bf16.msra.mxu0 0
      %603 = vmatprep.subr.bf16.mxu0 0
      %604 = vmatpush2.bf16.msra.mxu0 0
      %605 = vmatprep.subr.bf16.mxu0 0
      %606 = vmatpush2.bf16.msra.mxu0 0
      %607 = vmatprep.subr.bf16.mxu0 0
      %608 = vmatpush2.bf16.msra.mxu0 0
      %609 = vmatprep.subr.bf16.mxu0 0
      %610 = vmatpush2.bf16.msra.mxu0 0
      %611 = vmatprep.subr.bf16.mxu0 0
      %612 = vmatpush2.bf16.msra.mxu0 0
      %613 = vmatprep.mubr.bf16.mxu0 0
      %614 = vmatmul.mubr.bf16.gmra.mxu0 %v576
      %v615 = vpop.f32.mrf.mxu0
      %v616 = vadd.f32 0.0, %v615
      %v617 = vpop.f32.mrf.mxu0
      %v618 = vadd.f32 0.0, %v617
      %v619 = vpop.f32.mrf.mxu0
      %v620 = vadd.f32 0.0, %v619
      %v621 = vpop.f32.mrf.mxu0
      %v622 = vadd.f32 0.0, %v621
      %623 = vmatprep.mubr.bf16.mxu0 0
      %624 = vmatmul.mubr.bf16.gmra.mxu0 %v579
      %v625 = vpop.f32.mrf.mxu0
      %v626 = vadd.f32 0.0, %v625
      %v627 = vpop.f32.mrf.mxu0
      %v628 = vadd.f32 0.0, %v627
      %v629 = vpop.f32.mrf.mxu0
      %v630 = vadd.f32 0.0, %v629
      %v631 = vpop.f32.mrf.mxu0
      %v632 = vadd.f32 0.0, %v631
      %633 = vdwg.mxu0
      %v638 = vunpack.c.l.b16 %v548
      %v639 = vunpack.c.l.b16 %v549
      %v640 = vunpack.c.l.b16 %v550
      %v641 = vunpack.c.l.b16 %v551
      %v642 = vpack.c.b16 %v639, %v638
      %v643 = vpack.c.b16 %v641, %v640
      %v645 = vsel %vm574, %v642, 0
      %v648 = vsel %vm574, %v643, 0
      %650 = vmatprep.subr.bf16.mxu0 0
      %651 = vmatpush1.bf16.msra.mxu0 0
      %652 = vmatprep.subr.bf16.mxu0 0
      %653 = vmatpush1.bf16.msra.mxu0 0
      %654 = vmatprep.subr.bf16.mxu0 0
      %655 = vmatpush1.bf16.msra.mxu0 0
      %656 = vmatprep.subr.bf16.mxu0 0
      %657 = vmatpush1.bf16.msra.mxu0 0
      %658 = vmatprep.subr.bf16.mxu0 0
      %659 = vmatpush1.bf16.msra.mxu0 0
      %660 = vmatprep.subr.bf16.mxu0 0
      %661 = vmatpush1.bf16.msra.mxu0 0
      %662 = vmatprep.subr.bf16.mxu0 %v555
      %663 = vmatpush1.bf16.msra.mxu0 %v554
      %664 = vmatprep.subr.bf16.mxu0 %v553
      %665 = vmatpush1.bf16.msra.mxu0 %v552
      %666 = vmatprep.subr.bf16.mxu0 0
      %667 = vmatpush2.bf16.msra.mxu0 0
      %668 = vmatprep.subr.bf16.mxu0 0
      %669 = vmatpush2.bf16.msra.mxu0 0
      %670 = vmatprep.subr.bf16.mxu0 0
      %671 = vmatpush2.bf16.msra.mxu0 0
      %672 = vmatprep.subr.bf16.mxu0 0
      %673 = vmatpush2.bf16.msra.mxu0 0
      %674 = vmatprep.subr.bf16.mxu0 0
      %675 = vmatpush2.bf16.msra.mxu0 0
      %676 = vmatprep.subr.bf16.mxu0 0
      %677 = vmatpush2.bf16.msra.mxu0 0
      %678 = vmatprep.subr.bf16.mxu0 0
      %679 = vmatpush2.bf16.msra.mxu0 0
      %680 = vmatprep.subr.bf16.mxu0 0
      %681 = vmatpush2.bf16.msra.mxu0 0
      %682 = vmatprep.mubr.bf16.mxu0 0
      %683 = vmatmul.mubr.bf16.gmra.mxu0 %v645
      %v684 = vpop.f32.mrf.mxu0
      %v685 = vadd.f32 %v616, %v684
      %v686 = vpop.f32.mrf.mxu0
      %v687 = vadd.f32 %v618, %v686
      %v688 = vpop.f32.mrf.mxu0
      %v689 = vadd.f32 %v620, %v688
      %v690 = vpop.f32.mrf.mxu0
      %v691 = vadd.f32 %v622, %v690
      %692 = vmatprep.mubr.bf16.mxu0 0
      %693 = vmatmul.mubr.bf16.gmra.mxu0 %v648
      %v694 = vpop.f32.mrf.mxu0
      %v695 = vadd.f32 %v626, %v694
      %v696 = vpop.f32.mrf.mxu0
      %v697 = vadd.f32 %v628, %v696
      %v698 = vpop.f32.mrf.mxu0
      %v699 = vadd.f32 %v630, %v698
      %v700 = vpop.f32.mrf.mxu0
      %v701 = vadd.f32 %v632, %v700
      %702 = vdwg.mxu0
      %v703 = vld [vmem:[%s6] sm:$0xff]
      %v704 = vld [vmem:[%s6 + $0x8] sm:$0xff]
      %v705 = vld [vmem:[%s6 + $0x10] sm:$0xff]
      %v706 = vld [vmem:[%s6 + $0x18] sm:$0xff]
      %708 = vset.pattern.permute.xlu0 0
      %709 = vperm.xlu0 %708, %v703
      %v710 = vpop.permute.xlu0 %709
      %713 = vset.pattern.permute.xlu0 0
      %714 = vperm.xlu0 %713, %v704
      %v715 = vpop.permute.xlu0 %714
      %718 = vset.pattern.permute.xlu0 0
      %719 = vperm.xlu0 %718, %v705
      %v720 = vpop.permute.xlu0 %719
      %723 = vset.pattern.permute.xlu0 0
      %724 = vperm.xlu0 %723, %v706
      %v725 = vpop.permute.xlu0 %724
      %v727 = vadd.f32 %v685, %v710
      %v728 = vadd.f32 %v687, %v710
      %v729 = vadd.f32 %v689, %v715
      %v730 = vadd.f32 %v691, %v715
      %v731 = vadd.f32 %v695, %v720
      %v732 = vadd.f32 %v697, %v720
      %v733 = vadd.f32 %v699, %v725
      %v734 = vadd.f32 %v701, %v725
      %v735 = vmax.f32 %v727, 0.0
      %v736 = vmax.f32 %v728, 0.0
      %v737 = vmax.f32 %v729, 0.0
      %v738 = vmax.f32 %v730, 0.0
      %v739 = vmax.f32 %v731, 0.0
      %v740 = vmax.f32 %v732, 0.0
      %v741 = vmax.f32 %v733, 0.0
      %v742 = vmax.f32 %v734, 0.0
      %v743 = vld [vmem:[%s7] sm:$0xff]
      %v744 = vld [vmem:[%s7 + $0x8] sm:$0xff]
      %v745 = vld [vmem:[%s7 + $0x10] sm:$0xff]
      %v746 = vld [vmem:[%s7 + $0x18] sm:$0xff]
      %748 = vset.pattern.permute.xlu0 0
      %749 = vperm.xlu0 %748, %v743
      %v750 = vpop.permute.xlu0 %749
      %753 = vset.pattern.permute.xlu0 0
      %754 = vperm.xlu0 %753, %v744
      %v755 = vpop.permute.xlu0 %754
      %758 = vset.pattern.permute.xlu0 0
      %759 = vperm.xlu0 %758, %v745
      %v760 = vpop.permute.xlu0 %759
      %763 = vset.pattern.permute.xlu0 0
      %764 = vperm.xlu0 %763, %v746
      %v765 = vpop.permute.xlu0 %764
      %v767 = vmul.f32 %v735, %v750
      %v768 = vmul.f32 %v736, %v750
      %v769 = vmul.f32 %v737, %v755
      %v770 = vmul.f32 %v738, %v755
      %v771 = vmul.f32 %v739, %v760
      %v772 = vmul.f32 %v740, %v760
      %v773 = vmul.f32 %v741, %v765
      %v774 = vmul.f32 %v742, %v765
      %v775 = vadd.f32 %v767, %v769
      %v776 = vadd.f32 %v775, %v771
      %v777 = vadd.f32 %v776, %v773
      %v778 = vrot.slane %v777, 4
      %v779 = vadd.f32 %v777, %v778
      %v780 = vrot.slane %v779, 2
      %v781 = vadd.f32 %v779, %v780
      %v782 = vrot.slane %v781, 1
      %v783 = vadd.f32 %v781, %v782
      %v784 = vadd.f32 %v768, %v770
      %v785 = vadd.f32 %v784, %v772
      %v786 = vadd.f32 %v785, %v774
      %v787 = vrot.slane %v786, 4
      %v788 = vadd.f32 %v786, %v787
      %v789 = vrot.slane %v788, 2
      %v790 = vadd.f32 %v788, %v789
      %v791 = vrot.slane %v790, 1
      %v792 = vadd.f32 %v790, %v791
      %s793 = sld [smem:[#allocation2]]
      %v794 = vstv %s793
      %v795 = vadd.f32 %v783, %v794
      %v796 = vadd.f32 %v792, %v794
      %v799 = vcombine.low %v795, %v796
      %v801 = vunpack.c.l.s4 1966171168
      %v802 = vunpack.c.0.s8 %v801
      %v803 = vlaneseq
      %v804 = vshrl.u32 %v803, 7
      %v805 = vsub.s32 %v802, %v804
      %v806 = vrot.slane %v799, %v805
      %v808 = vunpack.c.l.s4 1966171168
      %v809 = vunpack.c.0.s8 %v808
      %v810 = vlaneseq
      %v811 = vshrl.u32 %v810, 7
      %v812 = vsub.s32 %v809, %v811
      %v813 = vrot.slane %v806, %v812
      %v815 = vlaneseq
      %vm816 = vcmp.ge.s32.totalorder %v815, 0
      %vm817 = vcmp.lt.s32.totalorder %v815, 256
      %vm818 = vmand %vm816, %vm817
      %819 = vst.msk [vmem:[%s349] sm:$0x3] %vm818, %v813
      %s820 = smul.u32 2, %s21
      %p821 = scmp.lt.s32.totalorder %s820, 3
      %s822 = scalar_select %p821, %s820, 3
      %s823 = scalar_lea.vmem %s9, %s822
      // Predicated region
      $region57: #{linears_forward.1} parent=55 // pred_check
        %p824 = pneg %p238
      $region58: #{linears_forward.1} parent=55 // pred_check_branch
        %826 = sbr.rel (%p824) target = $region60
      $region59: #{linears_forward.1} parent=55 // pred_region
        %s827 = smul.u32 2, %s21
      $region60: #{linears_forward.1} parent=55 // pred_fallthru
        _
    $region56: #{linears_forward.1} parent=5 // pred_fallthru
      _
    %p828 = scmp.le.s32.totalorder 2, %s16
    // Predicated region
    $region61: #{linears_forward.1} parent=5 // pred_check
      %p829 = pneg %p828
    $region62: #{linears_forward.1} parent=5 // pred_check_branch
      %831 = sbr.rel (%p829) target = $region64
    $region63: #{linears_forward.1} parent=5 // pred_region
      %s832 = ssub.s32 %s16, 2
      // Predicated region
      $region65: #{linears_forward.1} parent=63 // pred_check
        %p833 = pneg %p244
      $region66: #{linears_forward.1} parent=63 // pred_check_branch
        %835 = sbr.rel (%p833) target = $region68
      $region67: #{linears_forward.1} parent=63 // pred_region
        %s836 = smul.u32 2, %s22
        %p837 = scmp.lt.s32.totalorder %s836, 3
        %s838 = scalar_select %p837, %s836, 3
        %s839 = scalar_lea.vmem %s9, %s838
      $region68: #{linears_forward.1} parent=63 // pred_fallthru
        _
    $region64: #{linears_forward.1} parent=5 // pred_fallthru
      _
  $region6: #{linears_forward.1} parent=0 // loop_footer
    %s20 = sadd.s32 1, %s16
  $region7: #{linears_forward.1} parent=0 // loop_footer_branch
    %15 = sbr.rel target = $region3
  $region8: #{linears_forward.1} parent=0 // loop_exit
    _

</llo_original>
